<compile_context>
chip_gen: v7x
topology: tpu7x:2x2x1
jax: 0.10.0
libtpu: 0.0.40
codegen_flags: <defaults>
</compile_context>

<pallas_src>
import functools
import math

import jax
import jax.numpy as jnp
from jax.experimental import pallas as pl
from jax.experimental.pallas import tpu as pltpu


def _paged_ranker_kernel(scores_ref, predicts_ref, out_ref,
                         valid_acc, rank_acc, *, ks, n_total, block_n):
    nj = pl.program_id(1)

    @pl.when(nj == 0)
    def _init():
        valid_acc[...] = jnp.zeros_like(valid_acc)
        rank_acc[...] = jnp.zeros_like(rank_acc)

    # Native-dtype compares (no whole-tile upcast, no mask materialization):
    # the compare results feed the lane reduce (XLU) directly.
    scores = scores_ref[...]                                    # (TB, TN) native
    predicts = predicts_ref[...]                                # (TB, 1)  native
    thr = jnp.asarray(-10000.0, dtype=scores.dtype)

    valid = scores > thr
    greater = predicts < scores

    if n_total % block_n != 0:
        # Ragged last N block: mask out-of-range columns (static branch, only
        # emitted when N is not a multiple of block_n).
        col = nj * block_n + jax.lax.broadcasted_iota(jnp.int32, scores.shape, 1)
        in_range = col < n_total
        valid = jnp.logical_and(valid, in_range)
        greater = jnp.logical_and(greater, in_range)

    valid_acc[...] += jnp.sum(valid.astype(jnp.float32), axis=-1, keepdims=True)
    rank_acc[...] += jnp.sum(greater.astype(jnp.float32), axis=-1, keepdims=True)

    @pl.when(nj == pl.num_programs(1) - 1)
    def _finalize():
        valid_length = valid_acc[...]                           # (TB, 1) f32
        rank = rank_acc[...]                                    # (TB, 1) f32
        # Exact divides: they act on (TB,1) data only, cost is negligible.
        inv_log2_rank = jnp.float32(math.log(2.0)) / jnp.log(rank + 2.0)
        cols = []
        for k in ks:
            ind = (rank < jnp.float32(k)).astype(jnp.float32)
            cols.append(inv_log2_rank * ind)                    # NDCG@k term
            cols.append(ind)                                    # HR@k   term
        cols.append(1.0 / (rank + 1.0))                         # MRR    term
        cols.append(1.0 - rank / valid_length)                  # AUC-like term
        # One dense store of the whole (TB, m) tile.
        out_ref[...] = jnp.concatenate(cols, axis=-1)


def paged_ranker(scores, labels, ks, *, block_b=None, block_n=None,
                 tile_budget_bytes=4 << 20):
    """JAX/Pallas equivalent of PagedRanker(ks)(scores, labels)."""
    b, n = scores.shape
    m = 2 * len(ks) + 2

    labels = jnp.reshape(labels, (b,)).astype(jnp.int32)        # == labels.squeeze()
    # Hoisted label gather (trivial (B,)-sized XLA gather); kept in the scores'
    # native dtype so the strict '<' tie handling is unchanged.
    predicts = jnp.take_along_axis(scores, labels[:, None], axis=1)

    itemsize = jnp.dtype(scores.dtype).itemsize

    if block_n is None:
        if 16 * n * itemsize <= tile_budget_bytes:
            block_n = n                                          # N fits; batch-only grid
        else:
            bb = b if b <= 256 else 256
            block_n = max(128, (tile_budget_bytes // (bb * itemsize)) // 128 * 128)
            block_n = min(block_n, n)
    if block_b is None:
        if block_n == n:
            rows = max(16, tile_budget_bytes // max(1, n * itemsize))
        else:
            rows = 256
        # Multiple of 16 satisfies both f32 (8,128) and bf16 (16,128) sublane
        # tiling; block_b == b (full dim) is always legal.
        block_b = b if b <= rows else (rows // 16) * 16

    num_b = pl.cdiv(b, block_b)
    num_n = pl.cdiv(n, block_n)

    per_row = pl.pallas_call(
        functools.partial(_paged_ranker_kernel, ks=tuple(ks),
                          n_total=n, block_n=block_n),
        out_shape=jax.ShapeDtypeStruct((b, m), jnp.float32),
        grid_spec=pltpu.PrefetchScalarGridSpec(
            num_scalar_prefetch=0,
            grid=(num_b, num_n),                                 # reduction (N) axis last
            in_specs=[
                pl.BlockSpec((block_b, block_n), lambda i, j: (i, j)),  # native scores
                pl.BlockSpec((block_b, 1), lambda i, j: (i, 0)),        # gathered predicts
            ],
            out_specs=pl.BlockSpec((block_b, m), lambda i, j: (i, 0)),
            scratch_shapes=[
                pltpu.VMEM((block_b, 1), jnp.float32),           # valid_length accumulator
                pltpu.VMEM((block_b, 1), jnp.float32),           # rank accumulator
            ],
        ),
        compiler_params=pltpu.CompilerParams(
            dimension_semantics=("parallel", "arbitrary"),
            vmem_limit_bytes=48 * 1024 * 1024,                   # headroom under v7x 64 MiB
        ),
    )(scores, predicts)

    # TODO(synk): optionally fold the batch mean into the kernel (lane-dense
    # accumulator) if the narrow (m<128) writeback ever shows up in the bundle.
    metrics = jnp.mean(per_row, axis=0)                          # final batch mean (glue)
    res = [metrics[i] for i in range(m)]
    return res + [None]                                          # matches torch signature


def _paged_ranker_ref(scores, labels, ks):
    """Pure-JAX reference mirroring the PyTorch module."""
    scores = scores.astype(jnp.float32)
    labels = jnp.reshape(labels, (-1,))
    predicts = scores[jnp.arange(scores.shape[0]), labels][:, None]
    valid_length = jnp.sum(scores > -10000.0, axis=-1).astype(jnp.float32)
    rank = jnp.sum(predicts < scores, axis=-1).astype(jnp.float32)
    res = []
    for k in ks:
        ind = (rank < k).astype(jnp.float32)
        res.append(jnp.mean(1.0 / jnp.log2(rank + 2.0) * ind))
        res.append(jnp.mean(ind))
    res.append(jnp.mean(1.0 / (rank + 1.0)))
    res.append(jnp.mean(1.0 - rank / valid_length))
    return res


if __name__ == "__main__":
    key = jax.random.PRNGKey(0)
    ks = (1, 5, 10)

    def make_inputs(key, b, n, dtype=jnp.float32):
        k_scores, k_labels, k_lens = jax.random.split(key, 3)
        scores = jax.random.normal(k_scores, (b, n), dtype=jnp.float32)
        # Pad a random tail of each row with a very negative value so that
        # valid_length (scores > -10000) is exercised.
        valid_lens = jax.random.randint(k_lens, (b, 1), minval=n // 2, maxval=n + 1)
        col = jnp.arange(n)[None, :]
        scores = jnp.where(col < valid_lens, scores, jnp.float32(-100000.0))
        # Labels point inside the valid region; shape (B, 1) like torch.
        labels = jax.random.randint(k_labels, (b, 1), minval=0, maxval=n // 2)
        return scores.astype(dtype), labels

    def check(res, ref):
        vals = [jax.block_until_ready(v) for v in res[:-1]]
        assert res[-1] is None
        assert len(res) == 2 * len(ks) + 2 + 1
        for v, r in zip(vals, ref):
            assert jnp.isfinite(v), (float(v), float(r))
            assert abs(float(v) - float(r)) < 1e-2, (float(v), float(r))

    k0, k1, k2 = jax.random.split(key, 3)

    # Small f32 case: single tile (block_b = B, block_n = N).
    scores, labels = make_inputs(k0, 8, 128, jnp.float32)
    check(paged_ranker(scores, labels, ks), _paged_ranker_ref(scores, labels, ks))

    # Native bf16 path (no wrapper upcast; compares run in bf16 in-kernel).
    scores_bf16 = scores.astype(jnp.bfloat16)
    check(paged_ranker(scores_bf16, labels, ks),
          _paged_ranker_ref(scores_bf16, labels, ks))

    # Ragged batch + ragged N with forced small tiles: exercises the 2-D grid
    # (batch "parallel" x N "arbitrary"), the per-row count accumulators, the
    # in-kernel column masking, and masked OOB handling (no wrapper padding).
    scores2, labels2 = make_inputs(k1, 40, 320, jnp.float32)
    check(paged_ranker(scores2, labels2, ks, block_b=16, block_n=128),
          _paged_ranker_ref(scores2, labels2, ks))

    scores3, labels3 = make_inputs(k2, 48, 384, jnp.bfloat16)
    check(paged_ranker(scores3, labels3, ks, block_b=16, block_n=128),
          _paged_ranker_ref(scores3, labels3, ks))

    print("KERNEL_OK")
</pallas_src>

<mosaic_0001>
module attributes {stable_mosaic.version = 11 : i64} {
  func.func @_paged_ranker_kernel(%arg0: i32, %arg1: i32, %arg2: memref<8x128xf32, #tpu.memory_space<vmem>>, %arg3: memref<8x1xf32, #tpu.memory_space<vmem>>, %arg4: memref<8x8xf32, #tpu.memory_space<vmem>>, %arg5: memref<8x1xf32, #tpu.memory_space<vmem>>, %arg6: memref<8x1xf32, #tpu.memory_space<vmem>>) attributes {dimension_semantics = [#tpu.dimension_semantics<parallel>, #tpu.dimension_semantics<arbitrary>], iteration_bounds = array<i64: 1, 1>, scalar_prefetch = 0 : i64, scratch_operands = 2 : i64, tpu.core_type = #tpu.core_type<tc>, window_params = [{transform_indices = @transform_0, window_bounds = array<i64: 8, 128>}, {transform_indices = @transform_1, window_bounds = array<i64: 8, 1>}, {transform_indices = @transform_2, window_bounds = array<i64: 8, 8>}]} {
    %c0_i32 = arith.constant 0 : i32
    %0 = arith.cmpi eq, %arg1, %c0_i32 : i32
    %1 = arith.extui %0 : i1 to i32
    %c0_i32_0 = arith.constant 0 : i32
    %2 = arith.cmpi ne, %1, %c0_i32_0 : i32
    scf.if %2 {
      %cst_16 = arith.constant 0.000000e+00 : f32
      %26 = vector.broadcast %cst_16 : f32 to vector<8x1xf32>
      %c0_17 = arith.constant 0 : index
      %c0_18 = arith.constant 0 : index
      %27 = vector.load %arg5[%c0_17, %c0_18] : memref<8x1xf32, #tpu.memory_space<vmem>>, vector<8x1xf32>
      tpu.vector_store %arg5[%c0_17, %c0_18], %26 {strides = array<i32>} : memref<8x1xf32, #tpu.memory_space<vmem>>, vector<8x1xf32>,
      %cst_19 = arith.constant 0.000000e+00 : f32
      %28 = vector.broadcast %cst_19 : f32 to vector<8x1xf32>
      %c0_20 = arith.constant 0 : index
      %c0_21 = arith.constant 0 : index
      %29 = vector.load %arg6[%c0_20, %c0_21] : memref<8x1xf32, #tpu.memory_space<vmem>>, vector<8x1xf32>
      tpu.vector_store %arg6[%c0_20, %c0_21], %28 {strides = array<i32>} : memref<8x1xf32, #tpu.memory_space<vmem>>, vector<8x1xf32>,
    } else {
    }
    %c0 = arith.constant 0 : index
    %c0_1 = arith.constant 0 : index
    %3 = vector.load %arg2[%c0, %c0_1] : memref<8x128xf32, #tpu.memory_space<vmem>>, vector<8x128xf32>
    %c0_2 = arith.constant 0 : index
    %c0_3 = arith.constant 0 : index
    %4 = vector.load %arg3[%c0_2, %c0_3] : memref<8x1xf32, #tpu.memory_space<vmem>>, vector<8x1xf32>
    %cst = arith.constant -1.000000e+04 : f32
    %5 = vector.broadcast %cst : f32 to vector<8x128xf32>
    %6 = arith.cmpf ogt, %3, %5 : vector<8x128xf32>
    %7 = vector.broadcast %4 : vector<8x1xf32> to vector<8x128xf32>
    %8 = arith.cmpf olt, %7, %3 : vector<8x128xf32>
    %c0_4 = arith.constant 0 : index
    %c0_5 = arith.constant 0 : index
    %9 = vector.load %arg5[%c0_4, %c0_5] : memref<8x1xf32, #tpu.memory_space<vmem>>, vector<8x1xf32>
    %10 = arith.extui %6 : vector<8x128xi1> to vector<8x128xi32>
    %11 = arith.sitofp %10 : vector<8x128xi32> to vector<8x128xf32>
    %cst_6 = arith.constant dense<0.000000e+00> : vector<8xf32>
    %12 = vector.multi_reduction <add>, %11, %cst_6 [1] : vector<8x128xf32> to vector<8xf32>
    %13 = vector.shape_cast %12 : vector<8xf32> to vector<8x1xf32>
    %14 = arith.addf %9, %13 : vector<8x1xf32>
    %c0_7 = arith.constant 0 : index
    %c0_8 = arith.constant 0 : index
    %15 = vector.load %arg5[%c0_7, %c0_8] : memref<8x1xf32, #tpu.memory_space<vmem>>, vector<8x1xf32>
    tpu.vector_store %arg5[%c0_7, %c0_8], %14 {strides = array<i32>} : memref<8x1xf32, #tpu.memory_space<vmem>>, vector<8x1xf32>,
    %c0_9 = arith.constant 0 : index
    %c0_10 = arith.constant 0 : index
    %16 = vector.load %arg6[%c0_9, %c0_10] : memref<8x1xf32, #tpu.memory_space<vmem>>, vector<8x1xf32>
    %17 = arith.extui %8 : vector<8x128xi1> to vector<8x128xi32>
    %18 = arith.sitofp %17 : vector<8x128xi32> to vector<8x128xf32>
    %cst_11 = arith.constant dense<0.000000e+00> : vector<8xf32>
    %19 = vector.multi_reduction <add>, %18, %cst_11 [1] : vector<8x128xf32> to vector<8xf32>
    %20 = vector.shape_cast %19 : vector<8xf32> to vector<8x1xf32>
    %21 = arith.addf %16, %20 : vector<8x1xf32>
    %c0_12 = arith.constant 0 : index
    %c0_13 = arith.constant 0 : index
    %22 = vector.load %arg6[%c0_12, %c0_13] : memref<8x1xf32, #tpu.memory_space<vmem>>, vector<8x1xf32>
    tpu.vector_store %arg6[%c0_12, %c0_13], %21 {strides = array<i32>} : memref<8x1xf32, #tpu.memory_space<vmem>>, vector<8x1xf32>,
    %c0_i32_14 = arith.constant 0 : i32
    %23 = arith.cmpi eq, %arg1, %c0_i32_14 : i32
    %24 = arith.extui %23 : i1 to i32
    %c0_i32_15 = arith.constant 0 : i32
    %25 = arith.cmpi ne, %24, %c0_i32_15 : i32
    scf.if %25 {
      %c0_16 = arith.constant 0 : index
      %c0_17 = arith.constant 0 : index
      %26 = vector.load %arg5[%c0_16, %c0_17] : memref<8x1xf32, #tpu.memory_space<vmem>>, vector<8x1xf32>
      %c0_18 = arith.constant 0 : index
      %c0_19 = arith.constant 0 : index
      %27 = vector.load %arg6[%c0_18, %c0_19] : memref<8x1xf32, #tpu.memory_space<vmem>>, vector<8x1xf32>
      %cst_20 = arith.constant 2.000000e+00 : f32
      %28 = vector.broadcast %cst_20 : f32 to vector<8x1xf32>
      %29 = arith.addf %27, %28 : vector<8x1xf32>
      %30 = math.log %29 : vector<8x1xf32>
      %cst_21 = arith.constant 0.693147182 : f32
      %31 = vector.broadcast %cst_21 : f32 to vector<8x1xf32>
      %32 = arith.divf %31, %30 : vector<8x1xf32>
      %cst_22 = arith.constant 1.000000e+00 : f32
      %33 = vector.broadcast %cst_22 : f32 to vector<8x1xf32>
      %34 = arith.cmpf olt, %27, %33 : vector<8x1xf32>
      %35 = arith.extui %34 : vector<8x1xi1> to vector<8x1xi32>
      %36 = arith.sitofp %35 : vector<8x1xi32> to vector<8x1xf32>
      %37 = arith.mulf %32, %36 : vector<8x1xf32>
      %cst_23 = arith.constant 5.000000e+00 : f32
      %38 = vector.broadcast %cst_23 : f32 to vector<8x1xf32>
      %39 = arith.cmpf olt, %27, %38 : vector<8x1xf32>
      %40 = arith.extui %39 : vector<8x1xi1> to vector<8x1xi32>
      %41 = arith.sitofp %40 : vector<8x1xi32> to vector<8x1xf32>
      %42 = arith.mulf %32, %41 : vector<8x1xf32>
      %cst_24 = arith.constant 1.000000e+01 : f32
      %43 = vector.broadcast %cst_24 : f32 to vector<8x1xf32>
      %44 = arith.cmpf olt, %27, %43 : vector<8x1xf32>
      %45 = arith.extui %44 : vector<8x1xi1> to vector<8x1xi32>
      %46 = arith.sitofp %45 : vector<8x1xi32> to vector<8x1xf32>
      %47 = arith.mulf %32, %46 : vector<8x1xf32>
      %cst_25 = arith.constant 1.000000e+00 : f32
      %48 = vector.broadcast %cst_25 : f32 to vector<8x1xf32>
      %49 = arith.addf %27, %48 : vector<8x1xf32>
      %cst_26 = arith.constant 1.000000e+00 : f32
      %50 = vector.broadcast %cst_26 : f32 to vector<8x1xf32>
      %51 = arith.divf %50, %49 : vector<8x1xf32>
      %52 = arith.divf %27, %26 : vector<8x1xf32>
      %cst_27 = arith.constant 1.000000e+00 : f32
      %53 = vector.broadcast %cst_27 : f32 to vector<8x1xf32>
      %54 = arith.subf %53, %52 : vector<8x1xf32>
      %55 = tpu.concatenate %37, %36, %42, %41, %47, %46, %51, %54 in 1 : vector<8x1xf32>, vector<8x1xf32>, vector<8x1xf32>, vector<8x1xf32>, vector<8x1xf32>, vector<8x1xf32>, vector<8x1xf32>, vector<8x1xf32> -> vector<8x8xf32>
      %c0_28 = arith.constant 0 : index
      %c0_29 = arith.constant 0 : index
      %56 = vector.load %arg4[%c0_28, %c0_29] : memref<8x8xf32, #tpu.memory_space<vmem>>, vector<8x8xf32>
      tpu.vector_store %arg4[%c0_28, %c0_29], %55 {strides = array<i32>} : memref<8x8xf32, #tpu.memory_space<vmem>>, vector<8x8xf32>,
    } else {
    }
    return
  }
  func.func @transform_0(%arg0: i32, %arg1: i32) -> (i32, i32) {
    %c0_i32 = arith.constant 0 : i32
    return %arg0, %arg1 : i32, i32
  }
  func.func @transform_1(%arg0: i32, %arg1: i32) -> (i32, i32) {
    %c0_i32 = arith.constant 0 : i32
    %c0_i32_0 = arith.constant 0 : i32
    return %arg0, %c0_i32 : i32, i32
  }
  func.func @transform_2(%arg0: i32, %arg1: i32) -> (i32, i32) {
    %c0_i32 = arith.constant 0 : i32
    %c0_i32_0 = arith.constant 0 : i32
    return %arg0, %c0_i32 : i32, i32
  }
}

</mosaic_0001>

<llo_original>
// kernel: tpu_custom_call.1
$region0: #{tpu_custom_call.1}
  #allocation0 [shape = 'u32[]', space=smem, size = 0x4, offset = 0x4, fixed_abs, tag = 'smem constant byte address 0x4 - core index']
  #allocation1 [shape = 'u32[144,128]{1,0:T(1,128)}', space=vmem, size = 0x12000, scoped, tag = 'internal scratch']
  #allocation2 [shape = 'f32[8,1]{1,0:T(8,128)}', space=vmem, size = 0x1000, scoped, tag = 'scratch operand']
  #allocation3 [shape = 'f32[8,1]{1,0:T(8,128)}', space=vmem, size = 0x1000, scoped, tag = 'scratch operand']
  %s0 = inlined_call_operand.vmem [shape: f32[8,128], index: 0, kind: input, shape index: {}]
  %s1 = inlined_call_operand.vmem [shape: f32[8,1], index: 1, kind: input, shape index: {}]
  %s2 = inlined_call_operand.hbm [shape: f32[8,8], index: 2, kind: output, shape index: {}]
  %s3 = sld [smem:[#allocation0]]
  $region26: #{tpu_custom_call.1} parent=0
    _
  %s5 = ssub.s32 1, %s3
  %s6 = scalar_select 0, %s5, %s3
  $region1: #{tpu_custom_call.1} parent=0
    #allocation4 [shape = 'u8[4096]{0}', space=vmem, size = 0x1000, scoped, tag = 'output window, operand 0, single buffered']
    #allocation5 [shape = 's32[1]{0}', space=sflag, size = 0x4, scoped, tag = 'scoped memory for tpu_custom_call.1']
    %7 = vsyncpa [#allocation5], 0
    // Predicated region
    $region2: #{tpu_custom_call.1} parent=1 // pred_check
      _
    $region3: #{tpu_custom_call.1} parent=1 // pred_check_branch
      %9 = sbr.rel (0) target = $region5
    $region4: #{tpu_custom_call.1} parent=1 // pred_region
      _
    $region5: #{tpu_custom_call.1} parent=1 // pred_fallthru
      _
    // Predicated region
    $region6: #{tpu_custom_call.1} parent=1 // pred_check
      _
    $region7: #{tpu_custom_call.1} parent=1 // pred_check_branch
      %11 = sbr.rel (0) target = $region9
    $region8: #{tpu_custom_call.1} parent=1 // pred_region
      _
    $region9: #{tpu_custom_call.1} parent=1 // pred_fallthru
      _
    %p12 = scmp.eq.s32.totalorder 0, 0
    // Predicated region
    $region10: #{tpu_custom_call.1} parent=1 // pred_check
      %p13 = pneg %p12
    $region11: #{tpu_custom_call.1} parent=1 // pred_check_branch
      %15 = sbr.rel (%p13) target = $region13
    $region12: #{tpu_custom_call.1} parent=1 // pred_region
      %vm16 = vcmask 7168
      %17 = vst.msk [vmem:[#allocation2] sm:$0xff] %vm16, 0.0
      %18 = vst.msk [vmem:[#allocation3] sm:$0xff] %vm16, 0.0
    $region13: #{tpu_custom_call.1} parent=1 // pred_fallthru
      _
    %v19 = vld [vmem:[%s0] sm:$0xff]
    %v20 = vld [vmem:[%s1] sm:$0xff]
    %vm21 = vcmp.gt.f32.partialorder %v19, -10000.0
    %23 = vset.pattern.permute.xlu0 0
    %24 = vperm.xlu0 %23, %v20
    %v25 = vpop.permute.xlu0 %24
    %vm27 = vcmp.lt.f32.partialorder %v25, %v19
    %v28 = vld [vmem:[#allocation2] sm:$0xff]
    %v29 = vsel %vm21, 1, 0
    %v30 = vcvt.s32.f32 %v29
    %31 = vadd.xlane.f32.xlu0 %v30
    %v32 = vpop.xlane.xlu0 %31
    %v33 = vadd.f32 %v28, %v32
    %vm34 = vcmask 7168
    %35 = vst.msk [vmem:[#allocation2] sm:$0xff] %vm34, %v33
    %v36 = vld [vmem:[#allocation3] sm:$0xff]
    %v37 = vsel %vm27, 1, 0
    %v38 = vcvt.s32.f32 %v37
    %39 = vadd.xlane.f32.xlu0 %v38
    %v40 = vpop.xlane.xlu0 %39
    %v41 = vadd.f32 %v36, %v40
    %42 = vst.msk [vmem:[#allocation3] sm:$0xff] %vm34, %v41
    // Predicated region
    $region14: #{tpu_custom_call.1} parent=1 // pred_check
      %p43 = pneg %p12
    $region15: #{tpu_custom_call.1} parent=1 // pred_check_branch
      %45 = sbr.rel (%p43) target = $region17
    $region16: #{tpu_custom_call.1} parent=1 // pred_region
      %v46 = vld [vmem:[#allocation2] sm:$0xff]
      %v47 = vld [vmem:[#allocation3] sm:$0xff]
      %v48 = vadd.f32 %v47, 2.0
      %v49 = vlog2.pop %v48
      %v50 = vmul.f32 %v49, 0.6931472
      %v51 = vrcp.pop %v50
      %v52 = vmul.f32 0.6931472, %v51
      %vm53 = vcmp.lt.f32.partialorder %v47, 1.0
      %v54 = vsel %vm53, 1, 0
      %v55 = vcvt.s32.f32 %v54
      %v56 = vmul.f32 %v52, %v55
      %vm57 = vcmp.lt.f32.partialorder %v47, 5.0
      %v58 = vsel %vm57, 1, 0
      %v59 = vcvt.s32.f32 %v58
      %v60 = vmul.f32 %v52, %v59
      %vm61 = vcmp.lt.f32.partialorder %v47, 10.0
      %v62 = vsel %vm61, 1, 0
      %v63 = vcvt.s32.f32 %v62
      %v64 = vmul.f32 %v52, %v63
      %v65 = vadd.f32 %v47, 1.0
      %v66 = vrcp.pop %v65
      %v67 = vmul.f32 1.0, %v66
      %v68 = vrcp.pop %v46
      %v69 = vmul.f32 %v47, %v68
      %v70 = vsub.f32 1.0, %v69
      %72 = vrot.lane.b32.xlu0 %v55, 1
      %v73 = vpop.permute.xlu0 %72
      %76 = vrot.lane.b32.xlu0 %v60, 2
      %v77 = vpop.permute.xlu0 %76
      %80 = vrot.lane.b32.xlu0 %v59, 3
      %v81 = vpop.permute.xlu0 %80
      %84 = vrot.lane.b32.xlu0 %v64, 4
      %v85 = vpop.permute.xlu0 %84
      %88 = vrot.lane.b32.xlu0 %v63, 5
      %v89 = vpop.permute.xlu0 %88
      %92 = vrot.lane.b32.xlu0 %v67, 6
      %v93 = vpop.permute.xlu0 %92
      %96 = vrot.lane.b32.xlu0 %v70, 7
      %v97 = vpop.permute.xlu0 %96
      %v99 = vsel %vm34, %v56, %v73
      %vm100 = vcmask 15360
      %v101 = vsel %vm100, %v99, %v77
      %vm102 = vcmask 23552
      %v103 = vsel %vm102, %v101, %v81
      %vm104 = vcmask 31744
      %v105 = vsel %vm104, %v103, %v85
      %vm106 = vcmask 39936
      %v107 = vsel %vm106, %v105, %v89
      %vm108 = vcmask 48128
      %v109 = vsel %vm108, %v107, %v93
      %vm110 = vcmask 56320
      %v111 = vsel %vm110, %v109, %v97
      %vm112 = vcmask 64512
      %113 = vst.msk [vmem:[#allocation4] sm:$0xff] %vm112, %v111
    $region17: #{tpu_custom_call.1} parent=1 // pred_fallthru
      _
    // Predicated region
    $region18: #{tpu_custom_call.1} parent=1 // pred_check
      _
    $region19: #{tpu_custom_call.1} parent=1 // pred_check_branch
      %115 = sbr.rel (0) target = $region21
    $region20: #{tpu_custom_call.1} parent=1 // pred_region
      %s117 = ssub.s32 128, 128
      %118 = vsyncadd [#allocation5], %s117
      %s120 = sshll.u32 [#allocation4], 4
      %s121 = int_to_ptr.vmem [resolvable:$true] %s120
      %123 = dma.vmem_to_hbm [thread:$0]  %s121, 128, %s2, [#allocation5]
    $region21: #{tpu_custom_call.1} parent=1 // pred_fallthru
      _
    // Predicated region
    $region22: #{tpu_custom_call.1} parent=1 // pred_check
      _
    $region23: #{tpu_custom_call.1} parent=1 // pred_check_branch
      %125 = sbr.rel (0) target = $region25
    $region24: #{tpu_custom_call.1} parent=1 // pred_region
      %126 = dma.done [#allocation5], 128
    $region25: #{tpu_custom_call.1} parent=1 // pred_fallthru
      _
    %127 = vsyncpa [#allocation5], 1

</llo_original>
